<compile_context>
chip_gen: v7x
topology: tpu7x:2x2x1
jax: 0.10.0
libtpu: 0.0.40
codegen_flags: <defaults>
</compile_context>

<pallas_src>
import math

import jax
import jax.numpy as jnp
from jax.experimental import pallas as pl
from jax.experimental.pallas import tpu as pltpu

LATENT_DIM = 3
NUM_CLASSES = 10
EMB_DIM = 16
HIDDEN_DIM = 128
OUT_DIM = 28 * 28                        # 784 (un-padded; block dim == full dim)
BIAS_LANE = LATENT_DIM + NUM_CLASSES     # lane 13 carries the bias selector


def _round_up(x, m):
    return ((x + m - 1) // m) * m


def decoder_kernel(latent_ref, label_ref, wf_ref, wo_ref, bo_ref, out_ref):
    """One batch tile of the decoder forward.

    Fused hidden layer: build a lane-sparse input x (TB, 128)
        lanes 0..2  = latent values
        lanes 3..12 = one_hot(label)          (exact 0/1, bf16-safe)
        lane  13    = 1.0                     (bias selector)
    and hit the MXU once with the fused (128, 128) weight
        rows 0..2  = W_h[:, :3]^T
        rows 3..12 = relu(W_le^T + b_le) @ W_h[:, 3:]^T   (label table)
        row  13    = b_h
    so label-embedding -> ReLU -> concat -> fc_hidden is a single matmul.
    """
    latent = latent_ref[...]                               # (TB, 3)  f32
    labels = label_ref[...]                                # (TB, 1)  int32
    tb = latent.shape[0]

    lane = jax.lax.broadcasted_iota(jnp.int32, (tb, HIDDEN_DIM), 1)
    x = jnp.where(lane == 0, latent[:, 0:1], 0.0)
    x = jnp.where(lane == 1, latent[:, 1:2], x)
    x = jnp.where(lane == 2, latent[:, 2:3], x)
    x = jnp.where(lane == labels + LATENT_DIM, 1.0, x)     # one-hot, lanes 3..12
    x = jnp.where(lane == BIAS_LANE, 1.0, x)               # bias row selector

    h = jnp.dot(x.astype(jnp.bfloat16), wf_ref[...],
                preferred_element_type=jnp.float32)        # (TB, 128) f32 acc
    h = jnp.maximum(h, 0.0)                                # ReLU

    logits = jnp.dot(h.astype(jnp.bfloat16), wo_ref[...],
                     preferred_element_type=jnp.float32) + bo_ref[...]
    # sigmoid via a single EUP op (tanh) instead of exp + reciprocal.
    out_ref[...] = 0.5 * jnp.tanh(0.5 * logits) + 0.5      # (TB, 784) f32


def init_params(key):
    """Deterministic init mimicking PyTorch nn.Linear default U[-1/sqrt(fan_in), +]."""
    ks = jax.random.split(key, 6)

    def lin(kw, kb, fan_in, fan_out):
        bound = 1.0 / math.sqrt(fan_in)
        w = jax.random.uniform(kw, (fan_out, fan_in), jnp.float32, -bound, bound)
        b = jax.random.uniform(kb, (fan_out,), jnp.float32, -bound, bound)
        return w, b

    w_le, b_le = lin(ks[0], ks[1], NUM_CLASSES, EMB_DIM)               # (16, 10), (16,)
    w_h,  b_h  = lin(ks[2], ks[3], LATENT_DIM + EMB_DIM, HIDDEN_DIM)   # (128, 19), (128,)
    w_o,  b_o  = lin(ks[4], ks[5], HIDDEN_DIM, OUT_DIM)                # (784, 128), (784,)
    return dict(w_le=w_le, b_le=b_le, w_h=w_h, b_h=b_h, w_o=w_o, b_o=b_o)


def prepare_params(params):
    """One-time weight prep: fused hidden weight, transposes, bf16 casts."""
    w_le, b_le = params["w_le"], params["b_le"]
    w_h,  b_h  = params["w_h"], params["b_h"]
    w_o,  b_o  = params["w_o"], params["b_o"]

    # Label table: emb_table[c] = relu(one_hot(c) @ W_le^T + b_le) @ W_h[:, 3:]^T
    emb_rows = jnp.maximum(w_le.T + b_le[None, :], 0.0)                # (10, 16)
    emb_table = jnp.dot(emb_rows, w_h[:, LATENT_DIM:].T,
                        preferred_element_type=jnp.float32)            # (10, 128)

    # Fused (128, 128) hidden weight: latent rows + label table + bias row.
    w_fused = jnp.zeros((HIDDEN_DIM, HIDDEN_DIM), jnp.float32)
    w_fused = w_fused.at[0:LATENT_DIM, :].set(w_h[:, :LATENT_DIM].T)
    w_fused = w_fused.at[LATENT_DIM:BIAS_LANE, :].set(emb_table)
    w_fused = w_fused.at[BIAS_LANE, :].set(b_h)
    w_fused = w_fused.astype(jnp.bfloat16)

    # Big output weight: transpose, cast to bf16 (halves dominant weight bytes).
    wo = w_o.T.astype(jnp.bfloat16)                                    # (128, 784)
    bo = b_o.reshape(1, OUT_DIM).astype(jnp.float32)                   # (1, 784)

    return dict(w_fused=w_fused, wo=wo, bo=bo)


def decoder_forward(prep, latent_vector, label, *, block_batch=1024):
    """latent_vector: (B, 3) f32, label: (B,) int -> (B, 1, 28, 28) f32."""
    B = latent_vector.shape[0]
    latent = latent_vector.astype(jnp.float32)
    label2d = label.astype(jnp.int32).reshape(B, 1)

    # Batch tile: multiple of 8 sublanes; aim for >=2 grid steps so both v7x
    # TensorCores get work, capped at block_batch to amortize the ~0.35us
    # per-grid-step overhead for large batches.
    tb = min(block_batch, max(8, _round_up((B + 1) // 2, 8)))
    b_pad = _round_up(B, tb)
    if b_pad != B:
        latent = jnp.pad(latent, ((0, b_pad - B), (0, 0)))
        label2d = jnp.pad(label2d, ((0, b_pad - B), (0, 0)))

    grid = (b_pad // tb,)

    out = pl.pallas_call(
        decoder_kernel,
        out_shape=jax.ShapeDtypeStruct((b_pad, OUT_DIM), jnp.float32),
        grid=grid,
        in_specs=[
            pl.BlockSpec((tb, LATENT_DIM), lambda i: (i, 0)),             # latent
            pl.BlockSpec((tb, 1), lambda i: (i, 0)),                      # labels
            pl.BlockSpec((HIDDEN_DIM, HIDDEN_DIM), lambda i: (0, 0)),     # w_fused (bf16)
            pl.BlockSpec((HIDDEN_DIM, OUT_DIM), lambda i: (0, 0)),        # wo (bf16)
            pl.BlockSpec((1, OUT_DIM), lambda i: (0, 0)),                 # bo
        ],
        out_specs=pl.BlockSpec((tb, OUT_DIM), lambda i: (i, 0)),
        compiler_params=pltpu.CompilerParams(
            dimension_semantics=("parallel",),
            vmem_limit_bytes=32 * 1024 * 1024),
    )(latent, label2d, prep["w_fused"], prep["wo"], prep["bo"])

    # Only a (cheap) leading-dim slice remains when the batch was padded.
    return out[:B].reshape(B, 1, 28, 28)


if __name__ == "__main__":
    key = jax.random.PRNGKey(0)
    k_params, k_latent, k_label = jax.random.split(key, 3)

    params = init_params(k_params)
    prep = prepare_params(params)

    B = 8
    latent = jax.random.normal(k_latent, (B, LATENT_DIM), jnp.float32)
    label = jax.random.randint(k_label, (B,), 0, NUM_CLASSES, jnp.int32)

    img = decoder_forward(prep, latent, label)
    jax.block_until_ready(img)

    assert img.shape == (B, 1, 28, 28), img.shape
    assert img.dtype == jnp.float32
    assert bool(jnp.all((img >= 0.0) & (img <= 1.0)))

    # Cross-check against a plain-JAX f32 reference of the PyTorch forward.
    # Both matmul weights are stored in bf16 (f32 accumulation), so allow a
    # ~1e-2 absolute tolerance on the sigmoid outputs.
    one_hot = jax.nn.one_hot(label, NUM_CLASSES, dtype=jnp.float32)
    emb = jax.nn.relu(one_hot @ params["w_le"].T + params["b_le"])
    cat = jnp.concatenate([latent, emb], axis=1)
    hid = jax.nn.relu(cat @ params["w_h"].T + params["b_h"])
    ref = jax.nn.sigmoid(hid @ params["w_o"].T + params["b_o"]).reshape(B, 1, 28, 28)
    err = float(jnp.max(jnp.abs(img - ref)))
    assert err < 1e-2, err

    print("KERNEL_OK")
</pallas_src>

<mosaic_0001>
module attributes {stable_mosaic.version = 11 : i64} {
  func.func @decoder_kernel(%arg0: i32, %arg1: memref<8x3xf32, #tpu.memory_space<vmem>>, %arg2: memref<8x1xi32, #tpu.memory_space<vmem>>, %arg3: memref<128x128xbf16, #tpu.memory_space<vmem>>, %arg4: memref<128x784xbf16, #tpu.memory_space<vmem>>, %arg5: memref<1x784xf32, #tpu.memory_space<vmem>>, %arg6: memref<8x784xf32, #tpu.memory_space<vmem>>) attributes {dimension_semantics = [#tpu.dimension_semantics<parallel>], iteration_bounds = array<i64: 1>, scalar_prefetch = 0 : i64, scratch_operands = 0 : i64, tpu.core_type = #tpu.core_type<tc>, window_params = [{transform_indices = @transform_0, window_bounds = array<i64: 8, 3>}, {transform_indices = @transform_1, window_bounds = array<i64: 8, 1>}, {pipeline_mode = #tpu.pipeline_mode<synchronous>, transform_indices = @transform_2, window_bounds = array<i64: 128, 128>}, {pipeline_mode = #tpu.pipeline_mode<synchronous>, transform_indices = @transform_3, window_bounds = array<i64: 128, 784>}, {pipeline_mode = #tpu.pipeline_mode<synchronous>, transform_indices = @transform_4, window_bounds = array<i64: 1, 784>}, {transform_indices = @transform_5, window_bounds = array<i64: 8, 784>}]} {
    %c0 = arith.constant 0 : index
    %c0_0 = arith.constant 0 : index
    %0 = vector.load %arg1[%c0, %c0_0] : memref<8x3xf32, #tpu.memory_space<vmem>>, vector<8x3xf32>
    %c0_1 = arith.constant 0 : index
    %c0_2 = arith.constant 0 : index
    %1 = vector.load %arg2[%c0_1, %c0_2] : memref<8x1xi32, #tpu.memory_space<vmem>>, vector<8x1xi32>
    %2 = tpu.iota {dimensions = array<i32: 1>} : vector<8x128xi32>
    %c0_i32 = arith.constant 0 : i32
    %3 = vector.broadcast %c0_i32 : i32 to vector<8x128xi32>
    %4 = arith.cmpi eq, %2, %3 : vector<8x128xi32>
    %5 = vector.extract_strided_slice %0 {offsets = [0, 0], sizes = [8, 1], strides = [1, 1]} : vector<8x3xf32> to vector<8x1xf32>
    %cst = arith.constant 0.000000e+00 : f32
    %6 = vector.shape_cast %5 : vector<8x1xf32> to vector<8x1xf32>
    %7 = vector.broadcast %6 : vector<8x1xf32> to vector<8x128xf32>
    %8 = vector.broadcast %cst : f32 to vector<8x128xf32>
    %9 = arith.select %4, %7, %8 : vector<8x128xi1>, vector<8x128xf32>
    %c1_i32 = arith.constant 1 : i32
    %10 = vector.broadcast %c1_i32 : i32 to vector<8x128xi32>
    %11 = arith.cmpi eq, %2, %10 : vector<8x128xi32>
    %12 = vector.extract_strided_slice %0 {offsets = [0, 1], sizes = [8, 1], strides = [1, 1]} : vector<8x3xf32> to vector<8x1xf32>
    %13 = vector.shape_cast %12 : vector<8x1xf32> to vector<8x1xf32>
    %14 = vector.broadcast %13 : vector<8x1xf32> to vector<8x128xf32>
    %15 = arith.select %11, %14, %9 : vector<8x128xi1>, vector<8x128xf32>
    %c2_i32 = arith.constant 2 : i32
    %16 = vector.broadcast %c2_i32 : i32 to vector<8x128xi32>
    %17 = arith.cmpi eq, %2, %16 : vector<8x128xi32>
    %18 = vector.extract_strided_slice %0 {offsets = [0, 2], sizes = [8, 1], strides = [1, 1]} : vector<8x3xf32> to vector<8x1xf32>
    %19 = vector.shape_cast %18 : vector<8x1xf32> to vector<8x1xf32>
    %20 = vector.broadcast %19 : vector<8x1xf32> to vector<8x128xf32>
    %21 = arith.select %17, %20, %15 : vector<8x128xi1>, vector<8x128xf32>
    %c3_i32 = arith.constant 3 : i32
    %22 = vector.broadcast %c3_i32 : i32 to vector<8x1xi32>
    %23 = arith.addi %1, %22 : vector<8x1xi32>
    %24 = vector.broadcast %23 : vector<8x1xi32> to vector<8x128xi32>
    %25 = arith.cmpi eq, %2, %24 : vector<8x128xi32>
    %cst_3 = arith.constant 1.000000e+00 : f32
    %26 = vector.broadcast %cst_3 : f32 to vector<8x128xf32>
    %27 = arith.select %25, %26, %21 : vector<8x128xi1>, vector<8x128xf32>
    %c13_i32 = arith.constant 13 : i32
    %28 = vector.broadcast %c13_i32 : i32 to vector<8x128xi32>
    %29 = arith.cmpi eq, %2, %28 : vector<8x128xi32>
    %cst_4 = arith.constant 1.000000e+00 : f32
    %30 = vector.broadcast %cst_4 : f32 to vector<8x128xf32>
    %31 = arith.select %29, %30, %27 : vector<8x128xi1>, vector<8x128xf32>
    %32 = arith.truncf %31 : vector<8x128xf32> to vector<8x128xbf16>
    %c0_5 = arith.constant 0 : index
    %c0_6 = arith.constant 0 : index
    %33 = vector.load %arg3[%c0_5, %c0_6] : memref<128x128xbf16, #tpu.memory_space<vmem>>, vector<128x128xbf16>
    %cst_7 = arith.constant dense<0.000000e+00> : vector<8x128xf32>
    %34 = tpu.matmul %32, %33, %cst_7 {dimension_numbers = #tpu.dot_dimension_numbers<[1], [0], [0], [1], [0, 0, 1, 1], [], []>} : vector<8x128xbf16>, vector<128x128xbf16>, vector<8x128xf32> -> vector<8x128xf32>
    %cst_8 = arith.constant 0.000000e+00 : f32
    %35 = vector.broadcast %cst_8 : f32 to vector<8x128xf32>
    %36 = arith.maximumf %34, %35 : vector<8x128xf32>
    %37 = arith.truncf %36 : vector<8x128xf32> to vector<8x128xbf16>
    %c0_9 = arith.constant 0 : index
    %c0_10 = arith.constant 0 : index
    %38 = vector.load %arg4[%c0_9, %c0_10] : memref<128x784xbf16, #tpu.memory_space<vmem>>, vector<128x784xbf16>
    %cst_11 = arith.constant dense<0.000000e+00> : vector<8x784xf32>
    %39 = tpu.matmul %37, %38, %cst_11 {dimension_numbers = #tpu.dot_dimension_numbers<[1], [0], [0], [1], [0, 0, 1, 1], [], []>} : vector<8x128xbf16>, vector<128x784xbf16>, vector<8x784xf32> -> vector<8x784xf32>
    %c0_12 = arith.constant 0 : index
    %c0_13 = arith.constant 0 : index
    %40 = vector.load %arg5[%c0_12, %c0_13] : memref<1x784xf32, #tpu.memory_space<vmem>>, vector<1x784xf32>
    %41 = vector.broadcast %40 : vector<1x784xf32> to vector<8x784xf32>
    %42 = arith.addf %39, %41 : vector<8x784xf32>
    %cst_14 = arith.constant 5.000000e-01 : f32
    %43 = vector.broadcast %cst_14 : f32 to vector<8x784xf32>
    %44 = arith.mulf %43, %42 : vector<8x784xf32>
    %45 = math.tanh %44 : vector<8x784xf32>
    %cst_15 = arith.constant 5.000000e-01 : f32
    %46 = vector.broadcast %cst_15 : f32 to vector<8x784xf32>
    %47 = arith.mulf %46, %45 : vector<8x784xf32>
    %cst_16 = arith.constant 5.000000e-01 : f32
    %48 = vector.broadcast %cst_16 : f32 to vector<8x784xf32>
    %49 = arith.addf %47, %48 : vector<8x784xf32>
    %c0_17 = arith.constant 0 : index
    %c0_18 = arith.constant 0 : index
    %50 = vector.load %arg6[%c0_17, %c0_18] : memref<8x784xf32, #tpu.memory_space<vmem>>, vector<8x784xf32>
    tpu.vector_store %arg6[%c0_17, %c0_18], %49 {strides = array<i32>} : memref<8x784xf32, #tpu.memory_space<vmem>>, vector<8x784xf32>,
    return
  }
  func.func @transform_0(%arg0: i32) -> (i32, i32) {
    %c0_i32 = arith.constant 0 : i32
    %c0_i32_0 = arith.constant 0 : i32
    return %arg0, %c0_i32 : i32, i32
  }
  func.func @transform_1(%arg0: i32) -> (i32, i32) {
    %c0_i32 = arith.constant 0 : i32
    %c0_i32_0 = arith.constant 0 : i32
    return %arg0, %c0_i32 : i32, i32
  }
  func.func @transform_2(%arg0: i32) -> (i32, i32) {
    %c0_i32 = arith.constant 0 : i32
    %c0_i32_0 = arith.constant 0 : i32
    %c0_i32_1 = arith.constant 0 : i32
    return %c0_i32, %c0_i32_0 : i32, i32
  }
  func.func @transform_3(%arg0: i32) -> (i32, i32) {
    %c0_i32 = arith.constant 0 : i32
    %c0_i32_0 = arith.constant 0 : i32
    %c0_i32_1 = arith.constant 0 : i32
    return %c0_i32, %c0_i32_0 : i32, i32
  }
  func.func @transform_4(%arg0: i32) -> (i32, i32) {
    %c0_i32 = arith.constant 0 : i32
    %c0_i32_0 = arith.constant 0 : i32
    %c0_i32_1 = arith.constant 0 : i32
    return %c0_i32, %c0_i32_0 : i32, i32
  }
  func.func @transform_5(%arg0: i32) -> (i32, i32) {
    %c0_i32 = arith.constant 0 : i32
    %c0_i32_0 = arith.constant 0 : i32
    return %arg0, %c0_i32 : i32, i32
  }
}

</mosaic_0001>

<llo_original>
// kernel: tpu_custom_call.1
$region0: #{tpu_custom_call.1}
  #allocation0 [shape = 'u32[]', space=smem, size = 0x4, offset = 0x4, fixed_abs, tag = 'smem constant byte address 0x4 - core index']
  #allocation1 [shape = 'u32[144,128]{1,0:T(1,128)}', space=vmem, size = 0x12000, scoped, tag = 'internal scratch']
  %s0 = inlined_call_operand.vmem [shape: f32[8,3], index: 0, kind: input, shape index: {}]
  %s1 = inlined_call_operand.vmem [shape: s32[8,1], index: 1, kind: input, shape index: {}]
  %s2 = inlined_call_operand.vmem [shape: bf16[128,128], index: 2, kind: input, shape index: {}]
  %s3 = inlined_call_operand.vmem [shape: bf16[128,784], index: 3, kind: input, shape index: {}]
  %s4 = inlined_call_operand.vmem [shape: f32[1,784], index: 4, kind: input, shape index: {}]
  %s5 = inlined_call_operand.hbm [shape: f32[8,784], index: 5, kind: output, shape index: {}]
  %s6 = sld [smem:[#allocation0]]
  $region30: #{tpu_custom_call.1} parent=0
    _
  %s8 = ssub.s32 1, %s6
  %s9 = scalar_select 0, %s8, %s6
  $region1: #{tpu_custom_call.1} parent=0
    #allocation2 [shape = 'u8[28672]{0}', space=vmem, size = 0x7000, scoped, tag = 'output window, operand 0, single buffered']
    #allocation3 [shape = 's32[1]{0}', space=sflag, size = 0x4, scoped, tag = 'scoped memory for tpu_custom_call.1']
    %10 = vsyncpa [#allocation3], 0
    // Predicated region
    $region2: #{tpu_custom_call.1} parent=1 // pred_check
      _
    $region3: #{tpu_custom_call.1} parent=1 // pred_check_branch
      %12 = sbr.rel (0) target = $region5
    $region4: #{tpu_custom_call.1} parent=1 // pred_region
      _
    $region5: #{tpu_custom_call.1} parent=1 // pred_fallthru
      _
    // Predicated region
    $region6: #{tpu_custom_call.1} parent=1 // pred_check
      _
    $region7: #{tpu_custom_call.1} parent=1 // pred_check_branch
      %14 = sbr.rel (0) target = $region9
    $region8: #{tpu_custom_call.1} parent=1 // pred_region
      _
    $region9: #{tpu_custom_call.1} parent=1 // pred_fallthru
      _
    // Predicated region
    $region10: #{tpu_custom_call.1} parent=1 // pred_check
      _
    $region11: #{tpu_custom_call.1} parent=1 // pred_check_branch
      %16 = sbr.rel (0) target = $region13
    $region12: #{tpu_custom_call.1} parent=1 // pred_region
      _
    $region13: #{tpu_custom_call.1} parent=1 // pred_fallthru
      _
    // Predicated region
    $region14: #{tpu_custom_call.1} parent=1 // pred_check
      _
    $region15: #{tpu_custom_call.1} parent=1 // pred_check_branch
      %18 = sbr.rel (0) target = $region17
    $region16: #{tpu_custom_call.1} parent=1 // pred_region
      _
    $region17: #{tpu_custom_call.1} parent=1 // pred_fallthru
      _
    // Predicated region
    $region18: #{tpu_custom_call.1} parent=1 // pred_check
      _
    $region19: #{tpu_custom_call.1} parent=1 // pred_check_branch
      %20 = sbr.rel (0) target = $region21
    $region20: #{tpu_custom_call.1} parent=1 // pred_region
      _
    $region21: #{tpu_custom_call.1} parent=1 // pred_fallthru
      _
    %v22 = vld [vmem:[%s0] sm:$0xff]
    %v23 = vld [vmem:[%s1] sm:$0xff]
    %v24 = vlaneseq
    %v25 = vand.u32 %v24, 127
    %vm26 = vcmp.eq.s32.totalorder %v25, 0
    %28 = vset.pattern.permute.xlu0 0
    %29 = vperm.xlu0 %28, %v22
    %v30 = vpop.permute.xlu0 %29
    %v32 = vsel %vm26, %v30, 0.0
    %vm33 = vcmp.eq.s32.totalorder %v25, 1
    %34 = vset.pattern.permute.xlu0 1
    %35 = vperm.xlu0 %34, %v22
    %v36 = vpop.permute.xlu0 %35
    %v38 = vsel %vm33, %v36, %v32
    %vm39 = vcmp.eq.s32.totalorder %v25, 2
    %40 = vset.pattern.permute.xlu0 2
    %41 = vperm.xlu0 %40, %v22
    %v42 = vpop.permute.xlu0 %41
    %v44 = vsel %vm39, %v42, %v38
    %v45 = vadd.s32 %v23, 3
    %46 = vset.pattern.permute.xlu0 0
    %47 = vperm.xlu0 %46, %v45
    %v48 = vpop.permute.xlu0 %47
    %vm49 = vcmp.eq.s32.totalorder %v25, %v48
    %v50 = vsel %vm49, 1.0, %v44
    %vm51 = vcmp.eq.s32.totalorder %v25, 13
    %v52 = vsel %vm51, 1.0, %v50
    %v53 = vpack.c.bf16 %v52, %v52
    %v54 = vld [vmem:[%s2] sm:$0xf]
    %v55 = vld [vmem:[%s2 + $0x4] sm:$0xf]
    %v56 = vld [vmem:[%s2 + $0x8] sm:$0xf]
    %v57 = vld [vmem:[%s2 + $0xc] sm:$0xf]
    %v58 = vld [vmem:[%s2 + $0x10] sm:$0xf]
    %v59 = vld [vmem:[%s2 + $0x14] sm:$0xf]
    %v60 = vld [vmem:[%s2 + $0x18] sm:$0xf]
    %v61 = vld [vmem:[%s2 + $0x1c] sm:$0xf]
    %v62 = vld [vmem:[%s2 + $0x20] sm:$0xf]
    %v63 = vld [vmem:[%s2 + $0x24] sm:$0xf]
    %v64 = vld [vmem:[%s2 + $0x28] sm:$0xf]
    %v65 = vld [vmem:[%s2 + $0x2c] sm:$0xf]
    %v66 = vld [vmem:[%s2 + $0x30] sm:$0xf]
    %v67 = vld [vmem:[%s2 + $0x34] sm:$0xf]
    %v68 = vld [vmem:[%s2 + $0x38] sm:$0xf]
    %v69 = vld [vmem:[%s2 + $0x3c] sm:$0xf]
    %v86 = vunpack.c.l.b16 %v54
    %v87 = vunpack.c.l.b16 %v55
    %v88 = vunpack.c.l.b16 %v56
    %v89 = vunpack.c.l.b16 %v57
    %v90 = vunpack.c.l.b16 %v58
    %v91 = vunpack.c.l.b16 %v59
    %v92 = vunpack.c.l.b16 %v60
    %v93 = vunpack.c.l.b16 %v61
    %v94 = vunpack.c.l.b16 %v62
    %v95 = vunpack.c.l.b16 %v63
    %v96 = vunpack.c.l.b16 %v64
    %v97 = vunpack.c.l.b16 %v65
    %v98 = vunpack.c.l.b16 %v66
    %v99 = vunpack.c.l.b16 %v67
    %v100 = vunpack.c.l.b16 %v68
    %v101 = vunpack.c.l.b16 %v69
    %v102 = vpack.c.b16 %v87, %v86
    %v103 = vpack.c.b16 %v89, %v88
    %v104 = vpack.c.b16 %v91, %v90
    %v105 = vpack.c.b16 %v93, %v92
    %v106 = vpack.c.b16 %v95, %v94
    %v107 = vpack.c.b16 %v97, %v96
    %v108 = vpack.c.b16 %v99, %v98
    %v109 = vpack.c.b16 %v101, %v100
    %118 = vmatprep.subr.bf16.mxu0 0
    %119 = vmatpush1.bf16.msra.mxu0 %v102
    %120 = vmatprep.subr.bf16.mxu0 0
    %121 = vmatpush1.bf16.msra.mxu0 %v103
    %122 = vmatprep.subr.bf16.mxu0 0
    %123 = vmatpush1.bf16.msra.mxu0 %v104
    %124 = vmatprep.subr.bf16.mxu0 0
    %125 = vmatpush1.bf16.msra.mxu0 %v105
    %126 = vmatprep.subr.bf16.mxu0 0
    %127 = vmatpush1.bf16.msra.mxu0 %v106
    %128 = vmatprep.subr.bf16.mxu0 0
    %129 = vmatpush1.bf16.msra.mxu0 %v107
    %130 = vmatprep.subr.bf16.mxu0 0
    %131 = vmatpush1.bf16.msra.mxu0 %v108
    %132 = vmatprep.subr.bf16.mxu0 0
    %133 = vmatpush1.bf16.msra.mxu0 %v109
    %134 = vmatprep.subr.bf16.mxu0 0
    %135 = vmatpush1.bf16.msra.mxu0 0
    %136 = vmatprep.subr.bf16.mxu0 0
    %137 = vmatpush1.bf16.msra.mxu0 0
    %138 = vmatprep.subr.bf16.mxu0 0
    %139 = vmatpush1.bf16.msra.mxu0 0
    %140 = vmatprep.subr.bf16.mxu0 0
    %141 = vmatpush1.bf16.msra.mxu0 0
    %142 = vmatprep.subr.bf16.mxu0 0
    %143 = vmatpush1.bf16.msra.mxu0 0
    %144 = vmatprep.subr.bf16.mxu0 0
    %145 = vmatpush1.bf16.msra.mxu0 0
    %146 = vmatprep.subr.bf16.mxu0 0
    %147 = vmatpush1.bf16.msra.mxu0 0
    %148 = vmatprep.subr.bf16.mxu0 0
    %149 = vmatpush1.bf16.msra.mxu0 0
    %150 = vmatprep.mubr.bf16.mxu0 0
    %151 = vmatmul.mubr.bf16.gmra.mrb[0].mxu0 %v53
    %v152 = vpop.f32.mrb[0].mxu0
    %v153 = vadd.f32 0.0, %v152
    %v154 = vpop.f32.mrb[0].mxu0
    %v155 = vpop.f32.mrb[0].mxu0
    %v156 = vpop.f32.mrb[0].mxu0
    %157 = vdwg.mxu0
    %v158 = vmax.f32 %v153, 0.0
    %v159 = vpack.c.bf16 %v158, %v158
    %v160 = vld [vmem:[%s3] sm:$0xff]
    %v161 = vld [vmem:[%s3 + $0x8] sm:$0xff]
    %v162 = vld [vmem:[%s3 + $0x10] sm:$0xff]
    %v163 = vld [vmem:[%s3 + $0x18] sm:$0xf]
    %v164 = vld [vmem:[%s3 + $0x1c] sm:$0xff]
    %v165 = vld [vmem:[%s3 + $0x24] sm:$0xff]
    %v166 = vld [vmem:[%s3 + $0x2c] sm:$0xff]
    %v167 = vld [vmem:[%s3 + $0x34] sm:$0xf]
    %v168 = vld [vmem:[%s3 + $0x38] sm:$0xff]
    %v169 = vld [vmem:[%s3 + $0x40] sm:$0xff]
    %v170 = vld [vmem:[%s3 + $0x48] sm:$0xff]
    %v171 = vld [vmem:[%s3 + $0x50] sm:$0xf]
    %v172 = vld [vmem:[%s3 + $0x54] sm:$0xff]
    %v173 = vld [vmem:[%s3 + $0x5c] sm:$0xff]
    %v174 = vld [vmem:[%s3 + $0x64] sm:$0xff]
    %v175 = vld [vmem:[%s3 + $0x6c] sm:$0xf]
    %v176 = vld [vmem:[%s3 + $0x70] sm:$0xff]
    %v177 = vld [vmem:[%s3 + $0x78] sm:$0xff]
    %v178 = vld [vmem:[%s3 + $0x80] sm:$0xff]
    %v179 = vld [vmem:[%s3 + $0x88] sm:$0xf]
    %v180 = vld [vmem:[%s3 + $0x8c] sm:$0xff]
    %v181 = vld [vmem:[%s3 + $0x94] sm:$0xff]
    %v182 = vld [vmem:[%s3 + $0x9c] sm:$0xff]
    %v183 = vld [vmem:[%s3 + $0xa4] sm:$0xf]
    %v184 = vld [vmem:[%s3 + $0xa8] sm:$0xff]
    %v185 = vld [vmem:[%s3 + $0xb0] sm:$0xff]
    %v186 = vld [vmem:[%s3 + $0xb8] sm:$0xff]
    %v187 = vld [vmem:[%s3 + $0xc0] sm:$0xf]
    %v188 = vld [vmem:[%s3 + $0xc4] sm:$0xff]
    %v189 = vld [vmem:[%s3 + $0xcc] sm:$0xff]
    %v190 = vld [vmem:[%s3 + $0xd4] sm:$0xff]
    %v191 = vld [vmem:[%s3 + $0xdc] sm:$0xf]
    %v192 = vld [vmem:[%s3 + $0xe0] sm:$0xff]
    %v193 = vld [vmem:[%s3 + $0xe8] sm:$0xff]
    %v194 = vld [vmem:[%s3 + $0xf0] sm:$0xff]
    %v195 = vld [vmem:[%s3 + $0xf8] sm:$0xf]
    %v196 = vld [vmem:[%s3 + $0xfc] sm:$0xff]
    %v197 = vld [vmem:[%s3 + $0x104] sm:$0xff]
    %v198 = vld [vmem:[%s3 + $0x10c] sm:$0xff]
    %v199 = vld [vmem:[%s3 + $0x114] sm:$0xf]
    %v200 = vld [vmem:[%s3 + $0x118] sm:$0xff]
    %v201 = vld [vmem:[%s3 + $0x120] sm:$0xff]
    %v202 = vld [vmem:[%s3 + $0x128] sm:$0xff]
    %v203 = vld [vmem:[%s3 + $0x130] sm:$0xf]
    %v204 = vld [vmem:[%s3 + $0x134] sm:$0xff]
    %v205 = vld [vmem:[%s3 + $0x13c] sm:$0xff]
    %v206 = vld [vmem:[%s3 + $0x144] sm:$0xff]
    %v207 = vld [vmem:[%s3 + $0x14c] sm:$0xf]
    %v208 = vld [vmem:[%s3 + $0x150] sm:$0xff]
    %v209 = vld [vmem:[%s3 + $0x158] sm:$0xff]
    %v210 = vld [vmem:[%s3 + $0x160] sm:$0xff]
    %v211 = vld [vmem:[%s3 + $0x168] sm:$0xf]
    %v212 = vld [vmem:[%s3 + $0x16c] sm:$0xff]
    %v213 = vld [vmem:[%s3 + $0x174] sm:$0xff]
    %v214 = vld [vmem:[%s3 + $0x17c] sm:$0xff]
    %v215 = vld [vmem:[%s3 + $0x184] sm:$0xf]
    %v216 = vld [vmem:[%s3 + $0x188] sm:$0xff]
    %v217 = vld [vmem:[%s3 + $0x190] sm:$0xff]
    %v218 = vld [vmem:[%s3 + $0x198] sm:$0xff]
    %v219 = vld [vmem:[%s3 + $0x1a0] sm:$0xf]
    %v220 = vld [vmem:[%s3 + $0x1a4] sm:$0xff]
    %v221 = vld [vmem:[%s3 + $0x1ac] sm:$0xff]
    %v222 = vld [vmem:[%s3 + $0x1b4] sm:$0xff]
    %v223 = vld [vmem:[%s3 + $0x1bc] sm:$0xf]
    %v224 = vld [vmem:[%s4] sm:$0x7f]
    %v226 = vlaneseq
    %v227 = vshrl.u32 %v226, 7
    %v228 = vsub.s32 0, %v227
    %v229 = vrot.slane %v224, %v228
    %v230 = vlaneseq
    %v231 = vshrl.u32 %v230, 7
    %v232 = vsub.s32 1, %v231
    %v233 = vrot.slane %v224, %v232
    %v234 = vlaneseq
    %v235 = vshrl.u32 %v234, 7
    %v236 = vsub.s32 2, %v235
    %v237 = vrot.slane %v224, %v236
    %v238 = vlaneseq
    %v239 = vshrl.u32 %v238, 7
    %v240 = vsub.s32 3, %v239
    %v241 = vrot.slane %v224, %v240
    %v242 = vlaneseq
    %v243 = vshrl.u32 %v242, 7
    %v244 = vsub.s32 4, %v243
    %v245 = vrot.slane %v224, %v244
    %v246 = vlaneseq
    %v247 = vshrl.u32 %v246, 7
    %v248 = vsub.s32 5, %v247
    %v249 = vrot.slane %v224, %v248
    %v250 = vlaneseq
    %v251 = vshrl.u32 %v250, 7
    %v252 = vsub.s32 6, %v251
    %v253 = vrot.slane %v224, %v252
    %v325 = vunpack.c.l.b16 %v160
    %v326 = vunpack.c.h.b16 %v160
    %v327 = vunpack.c.l.b16 %v161
    %v328 = vunpack.c.h.b16 %v161
    %v329 = vunpack.c.l.b16 %v162
    %v330 = vunpack.c.h.b16 %v162
    %v331 = vunpack.c.l.b16 %v163
    %v332 = vunpack.c.l.b16 %v164
    %v333 = vunpack.c.h.b16 %v164
    %v334 = vunpack.c.l.b16 %v165
    %v335 = vunpack.c.h.b16 %v165
    %v336 = vunpack.c.l.b16 %v166
    %v337 = vunpack.c.h.b16 %v166
    %v338 = vunpack.c.l.b16 %v167
    %v339 = vunpack.c.l.b16 %v168
    %v340 = vunpack.c.h.b16 %v168
    %v341 = vunpack.c.l.b16 %v169
    %v342 = vunpack.c.h.b16 %v169
    %v343 = vunpack.c.l.b16 %v170
    %v344 = vunpack.c.h.b16 %v170
    %v345 = vunpack.c.l.b16 %v171
    %v346 = vunpack.c.l.b16 %v172
    %v347 = vunpack.c.h.b16 %v172
    %v348 = vunpack.c.l.b16 %v173
    %v349 = vunpack.c.h.b16 %v173
    %v350 = vunpack.c.l.b16 %v174
    %v351 = vunpack.c.h.b16 %v174
    %v352 = vunpack.c.l.b16 %v175
    %v353 = vunpack.c.l.b16 %v176
    %v354 = vunpack.c.h.b16 %v176
    %v355 = vunpack.c.l.b16 %v177
    %v356 = vunpack.c.h.b16 %v177
    %v357 = vunpack.c.l.b16 %v178
    %v358 = vunpack.c.h.b16 %v178
    %v359 = vunpack.c.l.b16 %v179
    %v360 = vunpack.c.l.b16 %v180
    %v361 = vunpack.c.h.b16 %v180
    %v362 = vunpack.c.l.b16 %v181
    %v363 = vunpack.c.h.b16 %v181
    %v364 = vunpack.c.l.b16 %v182
    %v365 = vunpack.c.h.b16 %v182
    %v366 = vunpack.c.l.b16 %v183
    %v367 = vunpack.c.l.b16 %v184
    %v368 = vunpack.c.h.b16 %v184
    %v369 = vunpack.c.l.b16 %v185
    %v370 = vunpack.c.h.b16 %v185
    %v371 = vunpack.c.l.b16 %v186
    %v372 = vunpack.c.h.b16 %v186
    %v373 = vunpack.c.l.b16 %v187
    %v374 = vunpack.c.l.b16 %v188
    %v375 = vunpack.c.h.b16 %v188
    %v376 = vunpack.c.l.b16 %v189
    %v377 = vunpack.c.h.b16 %v189
    %v378 = vunpack.c.l.b16 %v190
    %v379 = vunpack.c.h.b16 %v190
    %v380 = vunpack.c.l.b16 %v191
    %v381 = vunpack.c.l.b16 %v192
    %v382 = vunpack.c.h.b16 %v192
    %v383 = vunpack.c.l.b16 %v193
    %v384 = vunpack.c.h.b16 %v193
    %v385 = vunpack.c.l.b16 %v194
    %v386 = vunpack.c.h.b16 %v194
    %v387 = vunpack.c.l.b16 %v195
    %v388 = vunpack.c.l.b16 %v196
    %v389 = vunpack.c.h.b16 %v196
    %v390 = vunpack.c.l.b16 %v197
    %v391 = vunpack.c.h.b16 %v197
    %v392 = vunpack.c.l.b16 %v198
    %v393 = vunpack.c.h.b16 %v198
    %v394 = vunpack.c.l.b16 %v199
    %v395 = vunpack.c.l.b16 %v200
    %v396 = vunpack.c.h.b16 %v200
    %v397 = vunpack.c.l.b16 %v201
    %v398 = vunpack.c.h.b16 %v201
    %v399 = vunpack.c.l.b16 %v202
    %v400 = vunpack.c.h.b16 %v202
    %v401 = vunpack.c.l.b16 %v203
    %v402 = vunpack.c.l.b16 %v204
    %v403 = vunpack.c.h.b16 %v204
    %v404 = vunpack.c.l.b16 %v205
    %v405 = vunpack.c.h.b16 %v205
    %v406 = vunpack.c.l.b16 %v206
    %v407 = vunpack.c.h.b16 %v206
    %v408 = vunpack.c.l.b16 %v207
    %v409 = vunpack.c.l.b16 %v208
    %v410 = vunpack.c.h.b16 %v208
    %v411 = vunpack.c.l.b16 %v209
    %v412 = vunpack.c.h.b16 %v209
    %v413 = vunpack.c.l.b16 %v210
    %v414 = vunpack.c.h.b16 %v210
    %v415 = vunpack.c.l.b16 %v211
    %v416 = vunpack.c.l.b16 %v212
    %v417 = vunpack.c.h.b16 %v212
    %v418 = vunpack.c.l.b16 %v213
    %v419 = vunpack.c.h.b16 %v213
    %v420 = vunpack.c.l.b16 %v214
    %v421 = vunpack.c.h.b16 %v214
    %v422 = vunpack.c.l.b16 %v215
    %v423 = vunpack.c.l.b16 %v216
    %v424 = vunpack.c.h.b16 %v216
    %v425 = vunpack.c.l.b16 %v217
    %v426 = vunpack.c.h.b16 %v217
    %v427 = vunpack.c.l.b16 %v218
    %v428 = vunpack.c.h.b16 %v218
    %v429 = vunpack.c.l.b16 %v219
    %v430 = vunpack.c.l.b16 %v220
    %v431 = vunpack.c.h.b16 %v220
    %v432 = vunpack.c.l.b16 %v221
    %v433 = vunpack.c.h.b16 %v221
    %v434 = vunpack.c.l.b16 %v222
    %v435 = vunpack.c.h.b16 %v222
    %v436 = vunpack.c.l.b16 %v223
    %v437 = vpack.c.b16 %v332, %v325
    %v438 = vpack.c.b16 %v333, %v326
    %v439 = vpack.c.b16 %v334, %v327
    %v440 = vpack.c.b16 %v335, %v328
    %v441 = vpack.c.b16 %v336, %v329
    %v442 = vpack.c.b16 %v337, %v330
    %v443 = vpack.c.b16 %v338, %v331
    %v444 = vpack.c.b16 %v346, %v339
    %v445 = vpack.c.b16 %v347, %v340
    %v446 = vpack.c.b16 %v348, %v341
    %v447 = vpack.c.b16 %v349, %v342
    %v448 = vpack.c.b16 %v350, %v343
    %v449 = vpack.c.b16 %v351, %v344
    %v450 = vpack.c.b16 %v352, %v345
    %v451 = vpack.c.b16 %v360, %v353
    %v452 = vpack.c.b16 %v361, %v354
    %v453 = vpack.c.b16 %v362, %v355
    %v454 = vpack.c.b16 %v363, %v356
    %v455 = vpack.c.b16 %v364, %v357
    %v456 = vpack.c.b16 %v365, %v358
    %v457 = vpack.c.b16 %v366, %v359
    %v458 = vpack.c.b16 %v374, %v367
    %v459 = vpack.c.b16 %v375, %v368
    %v460 = vpack.c.b16 %v376, %v369
    %v461 = vpack.c.b16 %v377, %v370
    %v462 = vpack.c.b16 %v378, %v371
    %v463 = vpack.c.b16 %v379, %v372
    %v464 = vpack.c.b16 %v380, %v373
    %v465 = vpack.c.b16 %v388, %v381
    %v466 = vpack.c.b16 %v389, %v382
    %v467 = vpack.c.b16 %v390, %v383
    %v468 = vpack.c.b16 %v391, %v384
    %v469 = vpack.c.b16 %v392, %v385
    %v470 = vpack.c.b16 %v393, %v386
    %v471 = vpack.c.b16 %v394, %v387
    %v472 = vpack.c.b16 %v402, %v395
    %v473 = vpack.c.b16 %v403, %v396
    %v474 = vpack.c.b16 %v404, %v397
    %v475 = vpack.c.b16 %v405, %v398
    %v476 = vpack.c.b16 %v406, %v399
    %v477 = vpack.c.b16 %v407, %v400
    %v478 = vpack.c.b16 %v408, %v401
    %v479 = vpack.c.b16 %v416, %v409
    %v480 = vpack.c.b16 %v417, %v410
    %v481 = vpack.c.b16 %v418, %v411
    %v482 = vpack.c.b16 %v419, %v412
    %v483 = vpack.c.b16 %v420, %v413
    %v484 = vpack.c.b16 %v421, %v414
    %v485 = vpack.c.b16 %v422, %v415
    %v486 = vpack.c.b16 %v430, %v423
    %v487 = vpack.c.b16 %v431, %v424
    %v488 = vpack.c.b16 %v432, %v425
    %v489 = vpack.c.b16 %v433, %v426
    %v490 = vpack.c.b16 %v434, %v427
    %v491 = vpack.c.b16 %v435, %v428
    %v492 = vpack.c.b16 %v436, %v429
    %549 = vmatprep.subr.bf16.mxu0 %v438
    %550 = vmatpush1.bf16.msra.mxu0 %v437
    %551 = vmatprep.subr.bf16.mxu0 %v445
    %552 = vmatpush1.bf16.msra.mxu0 %v444
    %553 = vmatprep.subr.bf16.mxu0 %v452
    %554 = vmatpush1.bf16.msra.mxu0 %v451
    %555 = vmatprep.subr.bf16.mxu0 %v459
    %556 = vmatpush1.bf16.msra.mxu0 %v458
    %557 = vmatprep.subr.bf16.mxu0 %v466
    %558 = vmatpush1.bf16.msra.mxu0 %v465
    %559 = vmatprep.subr.bf16.mxu0 %v473
    %560 = vmatpush1.bf16.msra.mxu0 %v472
    %561 = vmatprep.subr.bf16.mxu0 %v480
    %562 = vmatpush1.bf16.msra.mxu0 %v479
    %563 = vmatprep.subr.bf16.mxu0 %v487
    %564 = vmatpush1.bf16.msra.mxu0 %v486
    %565 = vmatprep.subr.bf16.mxu0 0
    %566 = vmatpush1.bf16.msra.mxu0 0
    %567 = vmatprep.subr.bf16.mxu0 0
    %568 = vmatpush1.bf16.msra.mxu0 0
    %569 = vmatprep.subr.bf16.mxu0 0
    %570 = vmatpush1.bf16.msra.mxu0 0
    %571 = vmatprep.subr.bf16.mxu0 0
    %572 = vmatpush1.bf16.msra.mxu0 0
    %573 = vmatprep.subr.bf16.mxu0 0
    %574 = vmatpush1.bf16.msra.mxu0 0
    %575 = vmatprep.subr.bf16.mxu0 0
    %576 = vmatpush1.bf16.msra.mxu0 0
    %577 = vmatprep.subr.bf16.mxu0 0
    %578 = vmatpush1.bf16.msra.mxu0 0
    %579 = vmatprep.subr.bf16.mxu0 0
    %580 = vmatpush1.bf16.msra.mxu0 0
    %581 = vmatprep.mubr.bf16.mxu0 0
    %582 = vmatmul.mubr.bf16.gmra.mrb[0].mxu0 %v159
    %v583 = vpop.f32.mrb[0].mxu0
    %v584 = vadd.f32 %v229, %v583
    %v585 = vpop.f32.mrb[0].mxu0
    %v586 = vadd.f32 %v233, %v585
    %v587 = vpop.f32.mrb[0].mxu0
    %v588 = vpop.f32.mrb[0].mxu0
    %589 = vdwg.mxu0
    %590 = vmatprep.subr.bf16.mxu0 %v440
    %591 = vmatpush1.bf16.msra.mxu0 %v439
    %592 = vmatprep.subr.bf16.mxu0 %v447
    %593 = vmatpush1.bf16.msra.mxu0 %v446
    %594 = vmatprep.subr.bf16.mxu0 %v454
    %595 = vmatpush1.bf16.msra.mxu0 %v453
    %596 = vmatprep.subr.bf16.mxu0 %v461
    %597 = vmatpush1.bf16.msra.mxu0 %v460
    %598 = vmatprep.subr.bf16.mxu0 %v468
    %599 = vmatpush1.bf16.msra.mxu0 %v467
    %600 = vmatprep.subr.bf16.mxu0 %v475
    %601 = vmatpush1.bf16.msra.mxu0 %v474
    %602 = vmatprep.subr.bf16.mxu0 %v482
    %603 = vmatpush1.bf16.msra.mxu0 %v481
    %604 = vmatprep.subr.bf16.mxu0 %v489
    %605 = vmatpush1.bf16.msra.mxu0 %v488
    %606 = vmatprep.subr.bf16.mxu0 0
    %607 = vmatpush1.bf16.msra.mxu0 0
    %608 = vmatprep.subr.bf16.mxu0 0
    %609 = vmatpush1.bf16.msra.mxu0 0
    %610 = vmatprep.subr.bf16.mxu0 0
    %611 = vmatpush1.bf16.msra.mxu0 0
    %612 = vmatprep.subr.bf16.mxu0 0
    %613 = vmatpush1.bf16.msra.mxu0 0
    %614 = vmatprep.subr.bf16.mxu0 0
    %615 = vmatpush1.bf16.msra.mxu0 0
    %616 = vmatprep.subr.bf16.mxu0 0
    %617 = vmatpush1.bf16.msra.mxu0 0
    %618 = vmatprep.subr.bf16.mxu0 0
    %619 = vmatpush1.bf16.msra.mxu0 0
    %620 = vmatprep.subr.bf16.mxu0 0
    %621 = vmatpush1.bf16.msra.mxu0 0
    %622 = vmatprep.mubr.bf16.mxu0 0
    %623 = vmatmul.mubr.bf16.gmra.mrb[0].mxu0 %v159
    %v624 = vpop.f32.mrb[0].mxu0
    %v625 = vadd.f32 %v237, %v624
    %v626 = vpop.f32.mrb[0].mxu0
    %v627 = vadd.f32 %v241, %v626
    %v628 = vpop.f32.mrb[0].mxu0
    %v629 = vpop.f32.mrb[0].mxu0
    %630 = vdwg.mxu0
    %631 = vmatprep.subr.bf16.mxu0 %v442
    %632 = vmatpush1.bf16.msra.mxu0 %v441
    %633 = vmatprep.subr.bf16.mxu0 %v449
    %634 = vmatpush1.bf16.msra.mxu0 %v448
    %635 = vmatprep.subr.bf16.mxu0 %v456
    %636 = vmatpush1.bf16.msra.mxu0 %v455
    %637 = vmatprep.subr.bf16.mxu0 %v463
    %638 = vmatpush1.bf16.msra.mxu0 %v462
    %639 = vmatprep.subr.bf16.mxu0 %v470
    %640 = vmatpush1.bf16.msra.mxu0 %v469
    %641 = vmatprep.subr.bf16.mxu0 %v477
    %642 = vmatpush1.bf16.msra.mxu0 %v476
    %643 = vmatprep.subr.bf16.mxu0 %v484
    %644 = vmatpush1.bf16.msra.mxu0 %v483
    %645 = vmatprep.subr.bf16.mxu0 %v491
    %646 = vmatpush1.bf16.msra.mxu0 %v490
    %647 = vmatprep.subr.bf16.mxu0 0
    %648 = vmatpush1.bf16.msra.mxu0 0
    %649 = vmatprep.subr.bf16.mxu0 0
    %650 = vmatpush1.bf16.msra.mxu0 0
    %651 = vmatprep.subr.bf16.mxu0 0
    %652 = vmatpush1.bf16.msra.mxu0 0
    %653 = vmatprep.subr.bf16.mxu0 0
    %654 = vmatpush1.bf16.msra.mxu0 0
    %655 = vmatprep.subr.bf16.mxu0 0
    %656 = vmatpush1.bf16.msra.mxu0 0
    %657 = vmatprep.subr.bf16.mxu0 0
    %658 = vmatpush1.bf16.msra.mxu0 0
    %659 = vmatprep.subr.bf16.mxu0 0
    %660 = vmatpush1.bf16.msra.mxu0 0
    %661 = vmatprep.subr.bf16.mxu0 0
    %662 = vmatpush1.bf16.msra.mxu0 0
    %663 = vmatprep.mubr.bf16.mxu0 0
    %664 = vmatmul.mubr.bf16.gmra.mrb[0].mxu0 %v159
    %v665 = vpop.f32.mrb[0].mxu0
    %v666 = vadd.f32 %v245, %v665
    %v667 = vpop.f32.mrb[0].mxu0
    %v668 = vadd.f32 %v249, %v667
    %v669 = vpop.f32.mrb[0].mxu0
    %v670 = vpop.f32.mrb[0].mxu0
    %671 = vdwg.mxu0
    %672 = vmatprep.subr.bf16.mxu0 0
    %673 = vmatpush1.bf16.msra.mxu0 %v443
    %674 = vmatprep.subr.bf16.mxu0 0
    %675 = vmatpush1.bf16.msra.mxu0 %v450
    %676 = vmatprep.subr.bf16.mxu0 0
    %677 = vmatpush1.bf16.msra.mxu0 %v457
    %678 = vmatprep.subr.bf16.mxu0 0
    %679 = vmatpush1.bf16.msra.mxu0 %v464
    %680 = vmatprep.subr.bf16.mxu0 0
    %681 = vmatpush1.bf16.msra.mxu0 %v471
    %682 = vmatprep.subr.bf16.mxu0 0
    %683 = vmatpush1.bf16.msra.mxu0 %v478
    %684 = vmatprep.subr.bf16.mxu0 0
    %685 = vmatpush1.bf16.msra.mxu0 %v485
    %686 = vmatprep.subr.bf16.mxu0 0
    %687 = vmatpush1.bf16.msra.mxu0 %v492
    %688 = vmatprep.subr.bf16.mxu0 0
    %689 = vmatpush1.bf16.msra.mxu0 0
    %690 = vmatprep.subr.bf16.mxu0 0
    %691 = vmatpush1.bf16.msra.mxu0 0
    %692 = vmatprep.subr.bf16.mxu0 0
    %693 = vmatpush1.bf16.msra.mxu0 0
    %694 = vmatprep.subr.bf16.mxu0 0
    %695 = vmatpush1.bf16.msra.mxu0 0
    %696 = vmatprep.subr.bf16.mxu0 0
    %697 = vmatpush1.bf16.msra.mxu0 0
    %698 = vmatprep.subr.bf16.mxu0 0
    %699 = vmatpush1.bf16.msra.mxu0 0
    %700 = vmatprep.subr.bf16.mxu0 0
    %701 = vmatpush1.bf16.msra.mxu0 0
    %702 = vmatprep.subr.bf16.mxu0 0
    %703 = vmatpush1.bf16.msra.mxu0 0
    %704 = vmatprep.mubr.bf16.mxu0 0
    %705 = vmatmul.mubr.bf16.gmra.mrb[0].mxu0 %v159
    %v706 = vpop.f32.mrb[0].mxu0
    %v707 = vadd.f32 %v253, %v706
    %v708 = vpop.f32.mrb[0].mxu0
    %v709 = vpop.f32.mrb[0].mxu0
    %v710 = vpop.f32.mrb[0].mxu0
    %711 = vdwg.mxu0
    %v712 = vmul.f32 %v584, 0.5
    %v713 = vmul.f32 %v586, 0.5
    %v714 = vmul.f32 %v625, 0.5
    %v715 = vmul.f32 %v627, 0.5
    %v716 = vmul.f32 %v666, 0.5
    %v717 = vmul.f32 %v668, 0.5
    %v718 = vmul.f32 %v707, 0.5
    %v719 = vtanh.pop %v712
    %v720 = vtanh.pop %v713
    %v721 = vtanh.pop %v714
    %v722 = vtanh.pop %v715
    %v723 = vtanh.pop %v716
    %v724 = vtanh.pop %v717
    %v725 = vtanh.pop %v718
    %v726 = vmul.f32 %v719, 0.5
    %v727 = vmul.f32 %v720, 0.5
    %v728 = vmul.f32 %v721, 0.5
    %v729 = vmul.f32 %v722, 0.5
    %v730 = vmul.f32 %v723, 0.5
    %v731 = vmul.f32 %v724, 0.5
    %v732 = vmul.f32 %v725, 0.5
    %v733 = vadd.f32 %v726, 0.5
    %v734 = vadd.f32 %v727, 0.5
    %v735 = vadd.f32 %v728, 0.5
    %v736 = vadd.f32 %v729, 0.5
    %v737 = vadd.f32 %v730, 0.5
    %v738 = vadd.f32 %v731, 0.5
    %v739 = vadd.f32 %v732, 0.5
    %740 = vst [vmem:[#allocation2] sm:$0xff] %v733
    %741 = vst [vmem:[#allocation2 + $0x8] sm:$0xff] %v734
    %742 = vst [vmem:[#allocation2 + $0x10] sm:$0xff] %v735
    %743 = vst [vmem:[#allocation2 + $0x18] sm:$0xff] %v736
    %744 = vst [vmem:[#allocation2 + $0x20] sm:$0xff] %v737
    %745 = vst [vmem:[#allocation2 + $0x28] sm:$0xff] %v738
    %vm746 = vcmask 130048
    %747 = vst.msk [vmem:[#allocation2 + $0x30] sm:$0xff] %vm746, %v739
    // Predicated region
    $region22: #{tpu_custom_call.1} parent=1 // pred_check
      _
    $region23: #{tpu_custom_call.1} parent=1 // pred_check_branch
      %749 = sbr.rel (0) target = $region25
    $region24: #{tpu_custom_call.1} parent=1 // pred_region
      %s751 = ssub.s32 896, 896
      %752 = vsyncadd [#allocation3], %s751
      %s754 = sshll.u32 [#allocation2], 4
      %s755 = int_to_ptr.vmem [resolvable:$true] %s754
      %757 = dma.vmem_to_hbm [thread:$0]  %s755, 896, %s5, [#allocation3]
    $region25: #{tpu_custom_call.1} parent=1 // pred_fallthru
      _
    // Predicated region
    $region26: #{tpu_custom_call.1} parent=1 // pred_check
      _
    $region27: #{tpu_custom_call.1} parent=1 // pred_check_branch
      %759 = sbr.rel (0) target = $region29
    $region28: #{tpu_custom_call.1} parent=1 // pred_region
      %760 = dma.done [#allocation3], 896
    $region29: #{tpu_custom_call.1} parent=1 // pred_fallthru
      _
    %761 = vsyncpa [#allocation3], 1

</llo_original>
